<compile_context>
chip_gen: v6e
topology: v6e:2x2x1
jax: 0.10.0
libtpu: 0.0.40
codegen_flags: <defaults>
</compile_context>

<pallas_src>
import jax
import jax.numpy as jnp
from jax.experimental import pallas as pl
from jax.experimental.pallas import tpu as pltpu


def _iam_kernel(x_ref, w3_ref, b_ref, o_ref, a_ref):
    """Fused IAM forward for a block of bN batch samples.

    x_ref : (bN, nb, C, T)   input, viewed as num_blocks x channels x time
    w3_ref: (nb, Cout, C)    BN-folded 1x1-conv weight (w3[i, o, c] = W[o, i*C+c])
    b_ref : (Cout, 1)        BN-folded conv bias
    o_ref : (bN, Cout, T)    output
    a_ref : (Cout, nb*C)     f32 scratch: per-sample corr-folded conv weight
    """
    bN, nb, C, T = x_ref.shape
    Cout = o_ref.shape[1]

    # Tiny, resident weights (nb x (Cout, C)) and bias promoted to f32 once.
    w3 = [w3_ref[i].astype(jnp.float32) for i in range(nb)]
    bias = b_ref[...].astype(jnp.float32)                           # (Cout, 1)

    for b in range(bN):
        # One read of the sample; per-block views share it.
        xb = x_ref[b].astype(jnp.float32)                           # (nb, C, T)
        xs = [xb[i] for i in range(nb)]                             # nb x (C, T)

        # Correlation matrix corr[i, j] = sigmoid(<x_i, x_j>_Frobenius).
        # Symmetric -> only nb*(nb+1)/2 elementwise-mul + full-reduce passes
        # (VPU + XLU; negligible next to the conv matmul).
        corr = {}
        for i in range(nb):
            for j in range(i, nb):
                g = jnp.sum(xs[i] * xs[j], keepdims=True)           # (1, 1) f32
                s = jax.nn.sigmoid(g)                               # EUP
                corr[(i, j)] = s
                corr[(j, i)] = s

        # Fold (corr @ x + x) into the conv weight: A_j = W_j + sum_i corr[i,j]*W_i.
        # Assemble the folded weight into a (Cout, nb*C) slab (tiny VPU work).
        for j in range(nb):
            A_j = w3[j]
            for i in range(nb):
                A_j = A_j + corr[(i, j)] * w3[i]                    # (Cout, C), tiny
            a_ref[:, j * C:(j + 1) * C] = A_j

        # Single lane-dense MXU pass per sample: (Cout, nb*C) @ (nb*C, T).
        # Collapsing the two leading dims of xb is layout-free for C % 8 == 0.
        x_flat = xb.reshape(nb * C, T)
        y = jnp.dot(a_ref[...], x_flat,
                    preferred_element_type=jnp.float32) + bias      # (Cout, T)
        o_ref[b] = jnp.maximum(y, 0.0).astype(o_ref.dtype)          # ReLU, cast at store


def _pick_block_batch(batch, bytes_per_sample, budget_bytes=4 << 20, max_unroll=8):
    """Largest bN dividing `batch` that (a) fits the per-step VMEM budget,
    (b) keeps the unrolled kernel body small, and (c) keeps >= 2 grid steps
    so both TensorCores get work on megacore parts."""
    max_bn = max(1, min(batch, max_unroll, budget_bytes // max(1, bytes_per_sample)))
    for bn in range(max_bn, 0, -1):
        if batch % bn != 0:
            continue
        if batch >= 2 and (batch // bn) < 2 and bn != 1:
            continue
        return bn
    return 1


def iam_forward(x, conv_w, conv_b, bn_gamma, bn_beta, bn_mean, bn_var,
                *, num_blocks, eps=1e-5):
    """IAM forward. x: (B, num_blocks*channels, T); conv_w: (channels, num_blocks*channels)."""
    B, Cin, T = x.shape
    nb = num_blocks
    C = Cin // nb
    Cout = conv_w.shape[0]

    # Fold inference-mode BatchNorm into the 1x1 conv (free layout plumbing).
    scale = bn_gamma / jnp.sqrt(bn_var + eps)                       # (Cout,)
    w_bn = conv_w * scale[:, None]                                  # (Cout, Cin)
    b_bn = (conv_b - bn_mean) * scale + bn_beta                     # (Cout,)

    # Weight in (nb, Cout, C) layout so the kernel indexes blocks by leading dim.
    w3 = jnp.transpose(w_bn.reshape(Cout, nb, C), (1, 0, 2))        # (nb, Cout, C)
    b2 = b_bn.reshape(Cout, 1)                                      # (Cout, 1)

    # x viewed as (B, nb, C, T) — contiguous reshape, read from HBM exactly once.
    x4 = x.reshape(B, nb, C, T)

    bytes_per_sample = nb * C * T * x.dtype.itemsize
    bN = _pick_block_batch(B, bytes_per_sample)
    grid = (B // bN,)

    itemsize = x.dtype.itemsize
    cost = pl.CostEstimate(
        flops=int(B * (2 * nb * nb * C * T + 2 * Cout * nb * C * T)),
        transcendentals=int(B * nb * nb),
        bytes_accessed=int(B * nb * C * T * itemsize + B * Cout * T * itemsize
                           + w3.size * w3.dtype.itemsize + b2.size * b2.dtype.itemsize),
    )

    return pl.pallas_call(
        _iam_kernel,
        out_shape=jax.ShapeDtypeStruct((B, Cout, T), x.dtype),
        grid=grid,
        in_specs=[
            pl.BlockSpec((bN, nb, C, T), lambda n: (n, 0, 0, 0)),
            pl.BlockSpec((nb, Cout, C), lambda n: (0, 0, 0)),       # resident weights
            pl.BlockSpec((Cout, 1), lambda n: (0, 0)),              # resident bias
        ],
        out_specs=pl.BlockSpec((bN, Cout, T), lambda n: (n, 0, 0)),
        scratch_shapes=[pltpu.VMEM((Cout, nb * C), jnp.float32)],   # folded weight slab
        compiler_params=pltpu.CompilerParams(
            dimension_semantics=("parallel",)),
        cost_estimate=cost,
    )(x4, w3, b2)


def iam_ref(x, conv_w, conv_b, bn_gamma, bn_beta, bn_mean, bn_var,
            *, num_blocks, eps=1e-5):
    """Pure-JAX reference mirroring the PyTorch forward (eval-mode BN)."""
    B, Cin, T = x.shape
    hi = jax.lax.Precision.HIGHEST
    xb = x.reshape(B, num_blocks, -1)
    corr = jax.nn.sigmoid(jnp.einsum('bik,bjk->bij', xb, xb, precision=hi))
    xb = jnp.einsum('bij,bjk->bik', corr, xb, precision=hi) + xb
    xc = xb.reshape(B, Cin, T)
    y = jnp.einsum('oc,bct->bot', conv_w, xc, precision=hi) + conv_b[None, :, None]
    y = (y - bn_mean[None, :, None]) / jnp.sqrt(bn_var[None, :, None] + eps)
    y = y * bn_gamma[None, :, None] + bn_beta[None, :, None]
    return jnp.maximum(y, 0.0)


if __name__ == "__main__":
    B = 2
    num_blocks = 4
    channels = 16                     # C per block; also Conv1d output channels
    T = 128                           # lane-dense time axis (multiple of 128)
    Cin = num_blocks * channels

    key = jax.random.PRNGKey(0)
    kx, kw, kb, kg, kbe, km, kv = jax.random.split(key, 7)

    # Scale x so the correlation logits are in a non-saturated sigmoid range.
    x = jax.random.normal(kx, (B, Cin, T), dtype=jnp.float32) * 0.02
    conv_w = jax.random.normal(kw, (channels, Cin), dtype=jnp.float32) * (1.0 / Cin) ** 0.5
    conv_b = jax.random.normal(kb, (channels,), dtype=jnp.float32) * 0.05
    bn_gamma = 1.0 + 0.1 * jax.random.normal(kg, (channels,), dtype=jnp.float32)
    bn_beta = 0.1 * jax.random.normal(kbe, (channels,), dtype=jnp.float32)
    bn_mean = 0.05 * jax.random.normal(km, (channels,), dtype=jnp.float32)
    bn_var = jax.random.uniform(kv, (channels,), dtype=jnp.float32,
                                minval=0.5, maxval=1.5)

    out = iam_forward(x, conv_w, conv_b, bn_gamma, bn_beta, bn_mean, bn_var,
                      num_blocks=num_blocks)
    out = jax.block_until_ready(out)

    ref = iam_ref(x, conv_w, conv_b, bn_gamma, bn_beta, bn_mean, bn_var,
                  num_blocks=num_blocks)

    assert out.shape == (B, channels, T)
    assert jnp.allclose(out, ref, atol=1e-3, rtol=1e-3), (
        float(jnp.max(jnp.abs(out - ref))))

    print("KERNEL_OK")
</pallas_src>

<mosaic_0001>
module attributes {stable_mosaic.version = 11 : i64} {
  func.func @_iam_kernel(%arg0: i32, %arg1: memref<1x4x16x128xf32, #tpu.memory_space<vmem>>, %arg2: memref<4x16x16xf32, #tpu.memory_space<vmem>>, %arg3: memref<16x1xf32, #tpu.memory_space<vmem>>, %arg4: memref<1x16x128xf32, #tpu.memory_space<vmem>>, %arg5: memref<16x64xf32, #tpu.memory_space<vmem>>) attributes {dimension_semantics = [#tpu.dimension_semantics<parallel>], iteration_bounds = array<i64: 2>, scalar_prefetch = 0 : i64, scratch_operands = 1 : i64, tpu.core_type = #tpu.core_type<tc>, window_params = [{transform_indices = @transform_0, window_bounds = array<i64: 1, 4, 16, 128>}, {pipeline_mode = #tpu.pipeline_mode<synchronous>, transform_indices = @transform_1, window_bounds = array<i64: 4, 16, 16>}, {pipeline_mode = #tpu.pipeline_mode<synchronous>, transform_indices = @transform_2, window_bounds = array<i64: 16, 1>}, {transform_indices = @transform_3, window_bounds = array<i64: 1, 16, 128>}]} {
    %c0 = arith.constant 0 : index
    %c0_0 = arith.constant 0 : index
    %c0_1 = arith.constant 0 : index
    %0 = vector.load %arg2[%c0, %c0_0, %c0_1] : memref<4x16x16xf32, #tpu.memory_space<vmem>>, vector<1x16x16xf32>
    %1 = vector.shape_cast %0 : vector<1x16x16xf32> to vector<16x16xf32>
    %c1 = arith.constant 1 : index
    %c0_2 = arith.constant 0 : index
    %c0_3 = arith.constant 0 : index
    %2 = vector.load %arg2[%c1, %c0_2, %c0_3] : memref<4x16x16xf32, #tpu.memory_space<vmem>>, vector<1x16x16xf32>
    %3 = vector.shape_cast %2 : vector<1x16x16xf32> to vector<16x16xf32>
    %c2 = arith.constant 2 : index
    %c0_4 = arith.constant 0 : index
    %c0_5 = arith.constant 0 : index
    %4 = vector.load %arg2[%c2, %c0_4, %c0_5] : memref<4x16x16xf32, #tpu.memory_space<vmem>>, vector<1x16x16xf32>
    %5 = vector.shape_cast %4 : vector<1x16x16xf32> to vector<16x16xf32>
    %c3 = arith.constant 3 : index
    %c0_6 = arith.constant 0 : index
    %c0_7 = arith.constant 0 : index
    %6 = vector.load %arg2[%c3, %c0_6, %c0_7] : memref<4x16x16xf32, #tpu.memory_space<vmem>>, vector<1x16x16xf32>
    %7 = vector.shape_cast %6 : vector<1x16x16xf32> to vector<16x16xf32>
    %c0_8 = arith.constant 0 : index
    %c0_9 = arith.constant 0 : index
    %8 = vector.load %arg3[%c0_8, %c0_9] : memref<16x1xf32, #tpu.memory_space<vmem>>, vector<16x1xf32>
    %c0_10 = arith.constant 0 : index
    %c0_11 = arith.constant 0 : index
    %c0_12 = arith.constant 0 : index
    %c0_13 = arith.constant 0 : index
    %9 = vector.load %arg1[%c0_10, %c0_11, %c0_12, %c0_13] : memref<1x4x16x128xf32, #tpu.memory_space<vmem>>, vector<1x4x16x128xf32>
    %10 = vector.shape_cast %9 : vector<1x4x16x128xf32> to vector<4x16x128xf32>
    %11 = vector.extract_strided_slice %10 {offsets = [0, 0, 0], sizes = [1, 16, 128], strides = [1, 1, 1]} : vector<4x16x128xf32> to vector<1x16x128xf32>
    %12 = vector.shape_cast %11 : vector<1x16x128xf32> to vector<16x128xf32>
    %13 = vector.extract_strided_slice %10 {offsets = [1, 0, 0], sizes = [1, 16, 128], strides = [1, 1, 1]} : vector<4x16x128xf32> to vector<1x16x128xf32>
    %14 = vector.shape_cast %13 : vector<1x16x128xf32> to vector<16x128xf32>
    %15 = vector.extract_strided_slice %10 {offsets = [2, 0, 0], sizes = [1, 16, 128], strides = [1, 1, 1]} : vector<4x16x128xf32> to vector<1x16x128xf32>
    %16 = vector.shape_cast %15 : vector<1x16x128xf32> to vector<16x128xf32>
    %17 = vector.extract_strided_slice %10 {offsets = [3, 0, 0], sizes = [1, 16, 128], strides = [1, 1, 1]} : vector<4x16x128xf32> to vector<1x16x128xf32>
    %18 = vector.shape_cast %17 : vector<1x16x128xf32> to vector<16x128xf32>
    %19 = arith.mulf %12, %12 : vector<16x128xf32>
    %20 = vector.shape_cast %19 : vector<16x128xf32> to vector<1x16x128xf32>
    %cst = arith.constant dense<0.000000e+00> : vector<1xf32>
    %21 = vector.multi_reduction <add>, %20, %cst [1, 2] : vector<1x16x128xf32> to vector<1xf32>
    %22 = vector.shape_cast %21 : vector<1xf32> to vector<1x1x1xf32>
    %23 = vector.extract %22[0, 0, 0] : f32 from vector<1x1x1xf32>
    %24 = vector.broadcast %23 : f32 to vector<1x1xf32>
    %25 = arith.negf %24 : vector<1x1xf32>
    %26 = math.exp %25 : vector<1x1xf32>
    %cst_14 = arith.constant 1.000000e+00 : f32
    %27 = vector.broadcast %cst_14 : f32 to vector<1x1xf32>
    %28 = arith.addf %27, %26 : vector<1x1xf32>
    %29 = arith.divf %27, %28 : vector<1x1xf32>
    %30 = arith.mulf %12, %14 : vector<16x128xf32>
    %31 = vector.shape_cast %30 : vector<16x128xf32> to vector<1x16x128xf32>
    %cst_15 = arith.constant dense<0.000000e+00> : vector<1xf32>
    %32 = vector.multi_reduction <add>, %31, %cst_15 [1, 2] : vector<1x16x128xf32> to vector<1xf32>
    %33 = vector.shape_cast %32 : vector<1xf32> to vector<1x1x1xf32>
    %34 = vector.extract %33[0, 0, 0] : f32 from vector<1x1x1xf32>
    %35 = vector.broadcast %34 : f32 to vector<1x1xf32>
    %36 = arith.negf %35 : vector<1x1xf32>
    %37 = math.exp %36 : vector<1x1xf32>
    %cst_16 = arith.constant 1.000000e+00 : f32
    %38 = vector.broadcast %cst_16 : f32 to vector<1x1xf32>
    %39 = arith.addf %38, %37 : vector<1x1xf32>
    %40 = arith.divf %38, %39 : vector<1x1xf32>
    %41 = arith.mulf %12, %16 : vector<16x128xf32>
    %42 = vector.shape_cast %41 : vector<16x128xf32> to vector<1x16x128xf32>
    %cst_17 = arith.constant dense<0.000000e+00> : vector<1xf32>
    %43 = vector.multi_reduction <add>, %42, %cst_17 [1, 2] : vector<1x16x128xf32> to vector<1xf32>
    %44 = vector.shape_cast %43 : vector<1xf32> to vector<1x1x1xf32>
    %45 = vector.extract %44[0, 0, 0] : f32 from vector<1x1x1xf32>
    %46 = vector.broadcast %45 : f32 to vector<1x1xf32>
    %47 = arith.negf %46 : vector<1x1xf32>
    %48 = math.exp %47 : vector<1x1xf32>
    %cst_18 = arith.constant 1.000000e+00 : f32
    %49 = vector.broadcast %cst_18 : f32 to vector<1x1xf32>
    %50 = arith.addf %49, %48 : vector<1x1xf32>
    %51 = arith.divf %49, %50 : vector<1x1xf32>
    %52 = arith.mulf %12, %18 : vector<16x128xf32>
    %53 = vector.shape_cast %52 : vector<16x128xf32> to vector<1x16x128xf32>
    %cst_19 = arith.constant dense<0.000000e+00> : vector<1xf32>
    %54 = vector.multi_reduction <add>, %53, %cst_19 [1, 2] : vector<1x16x128xf32> to vector<1xf32>
    %55 = vector.shape_cast %54 : vector<1xf32> to vector<1x1x1xf32>
    %56 = vector.extract %55[0, 0, 0] : f32 from vector<1x1x1xf32>
    %57 = vector.broadcast %56 : f32 to vector<1x1xf32>
    %58 = arith.negf %57 : vector<1x1xf32>
    %59 = math.exp %58 : vector<1x1xf32>
    %cst_20 = arith.constant 1.000000e+00 : f32
    %60 = vector.broadcast %cst_20 : f32 to vector<1x1xf32>
    %61 = arith.addf %60, %59 : vector<1x1xf32>
    %62 = arith.divf %60, %61 : vector<1x1xf32>
    %63 = arith.mulf %14, %14 : vector<16x128xf32>
    %64 = vector.shape_cast %63 : vector<16x128xf32> to vector<1x16x128xf32>
    %cst_21 = arith.constant dense<0.000000e+00> : vector<1xf32>
    %65 = vector.multi_reduction <add>, %64, %cst_21 [1, 2] : vector<1x16x128xf32> to vector<1xf32>
    %66 = vector.shape_cast %65 : vector<1xf32> to vector<1x1x1xf32>
    %67 = vector.extract %66[0, 0, 0] : f32 from vector<1x1x1xf32>
    %68 = vector.broadcast %67 : f32 to vector<1x1xf32>
    %69 = arith.negf %68 : vector<1x1xf32>
    %70 = math.exp %69 : vector<1x1xf32>
    %cst_22 = arith.constant 1.000000e+00 : f32
    %71 = vector.broadcast %cst_22 : f32 to vector<1x1xf32>
    %72 = arith.addf %71, %70 : vector<1x1xf32>
    %73 = arith.divf %71, %72 : vector<1x1xf32>
    %74 = arith.mulf %14, %16 : vector<16x128xf32>
    %75 = vector.shape_cast %74 : vector<16x128xf32> to vector<1x16x128xf32>
    %cst_23 = arith.constant dense<0.000000e+00> : vector<1xf32>
    %76 = vector.multi_reduction <add>, %75, %cst_23 [1, 2] : vector<1x16x128xf32> to vector<1xf32>
    %77 = vector.shape_cast %76 : vector<1xf32> to vector<1x1x1xf32>
    %78 = vector.extract %77[0, 0, 0] : f32 from vector<1x1x1xf32>
    %79 = vector.broadcast %78 : f32 to vector<1x1xf32>
    %80 = arith.negf %79 : vector<1x1xf32>
    %81 = math.exp %80 : vector<1x1xf32>
    %cst_24 = arith.constant 1.000000e+00 : f32
    %82 = vector.broadcast %cst_24 : f32 to vector<1x1xf32>
    %83 = arith.addf %82, %81 : vector<1x1xf32>
    %84 = arith.divf %82, %83 : vector<1x1xf32>
    %85 = arith.mulf %14, %18 : vector<16x128xf32>
    %86 = vector.shape_cast %85 : vector<16x128xf32> to vector<1x16x128xf32>
    %cst_25 = arith.constant dense<0.000000e+00> : vector<1xf32>
    %87 = vector.multi_reduction <add>, %86, %cst_25 [1, 2] : vector<1x16x128xf32> to vector<1xf32>
    %88 = vector.shape_cast %87 : vector<1xf32> to vector<1x1x1xf32>
    %89 = vector.extract %88[0, 0, 0] : f32 from vector<1x1x1xf32>
    %90 = vector.broadcast %89 : f32 to vector<1x1xf32>
    %91 = arith.negf %90 : vector<1x1xf32>
    %92 = math.exp %91 : vector<1x1xf32>
    %cst_26 = arith.constant 1.000000e+00 : f32
    %93 = vector.broadcast %cst_26 : f32 to vector<1x1xf32>
    %94 = arith.addf %93, %92 : vector<1x1xf32>
    %95 = arith.divf %93, %94 : vector<1x1xf32>
    %96 = arith.mulf %16, %16 : vector<16x128xf32>
    %97 = vector.shape_cast %96 : vector<16x128xf32> to vector<1x16x128xf32>
    %cst_27 = arith.constant dense<0.000000e+00> : vector<1xf32>
    %98 = vector.multi_reduction <add>, %97, %cst_27 [1, 2] : vector<1x16x128xf32> to vector<1xf32>
    %99 = vector.shape_cast %98 : vector<1xf32> to vector<1x1x1xf32>
    %100 = vector.extract %99[0, 0, 0] : f32 from vector<1x1x1xf32>
    %101 = vector.broadcast %100 : f32 to vector<1x1xf32>
    %102 = arith.negf %101 : vector<1x1xf32>
    %103 = math.exp %102 : vector<1x1xf32>
    %cst_28 = arith.constant 1.000000e+00 : f32
    %104 = vector.broadcast %cst_28 : f32 to vector<1x1xf32>
    %105 = arith.addf %104, %103 : vector<1x1xf32>
    %106 = arith.divf %104, %105 : vector<1x1xf32>
    %107 = arith.mulf %16, %18 : vector<16x128xf32>
    %108 = vector.shape_cast %107 : vector<16x128xf32> to vector<1x16x128xf32>
    %cst_29 = arith.constant dense<0.000000e+00> : vector<1xf32>
    %109 = vector.multi_reduction <add>, %108, %cst_29 [1, 2] : vector<1x16x128xf32> to vector<1xf32>
    %110 = vector.shape_cast %109 : vector<1xf32> to vector<1x1x1xf32>
    %111 = vector.extract %110[0, 0, 0] : f32 from vector<1x1x1xf32>
    %112 = vector.broadcast %111 : f32 to vector<1x1xf32>
    %113 = arith.negf %112 : vector<1x1xf32>
    %114 = math.exp %113 : vector<1x1xf32>
    %cst_30 = arith.constant 1.000000e+00 : f32
    %115 = vector.broadcast %cst_30 : f32 to vector<1x1xf32>
    %116 = arith.addf %115, %114 : vector<1x1xf32>
    %117 = arith.divf %115, %116 : vector<1x1xf32>
    %118 = arith.mulf %18, %18 : vector<16x128xf32>
    %119 = vector.shape_cast %118 : vector<16x128xf32> to vector<1x16x128xf32>
    %cst_31 = arith.constant dense<0.000000e+00> : vector<1xf32>
    %120 = vector.multi_reduction <add>, %119, %cst_31 [1, 2] : vector<1x16x128xf32> to vector<1xf32>
    %121 = vector.shape_cast %120 : vector<1xf32> to vector<1x1x1xf32>
    %122 = vector.extract %121[0, 0, 0] : f32 from vector<1x1x1xf32>
    %123 = vector.broadcast %122 : f32 to vector<1x1xf32>
    %124 = arith.negf %123 : vector<1x1xf32>
    %125 = math.exp %124 : vector<1x1xf32>
    %cst_32 = arith.constant 1.000000e+00 : f32
    %126 = vector.broadcast %cst_32 : f32 to vector<1x1xf32>
    %127 = arith.addf %126, %125 : vector<1x1xf32>
    %128 = arith.divf %126, %127 : vector<1x1xf32>
    %129 = vector.broadcast %29 : vector<1x1xf32> to vector<16x16xf32>
    %130 = arith.mulf %129, %1 : vector<16x16xf32>
    %131 = arith.addf %1, %130 : vector<16x16xf32>
    %132 = vector.broadcast %40 : vector<1x1xf32> to vector<16x16xf32>
    %133 = arith.mulf %132, %3 : vector<16x16xf32>
    %134 = arith.addf %131, %133 : vector<16x16xf32>
    %135 = vector.broadcast %51 : vector<1x1xf32> to vector<16x16xf32>
    %136 = arith.mulf %135, %5 : vector<16x16xf32>
    %137 = arith.addf %134, %136 : vector<16x16xf32>
    %138 = vector.broadcast %62 : vector<1x1xf32> to vector<16x16xf32>
    %139 = arith.mulf %138, %7 : vector<16x16xf32>
    %140 = arith.addf %137, %139 : vector<16x16xf32>
    %c0_33 = arith.constant 0 : index
    %c0_34 = arith.constant 0 : index
    %141 = vector.load %arg5[%c0_33, %c0_34] : memref<16x64xf32, #tpu.memory_space<vmem>>, vector<16x16xf32>
    tpu.vector_store %arg5[%c0_33, %c0_34], %140 {strides = array<i32>} : memref<16x64xf32, #tpu.memory_space<vmem>>, vector<16x16xf32>,
    %142 = vector.broadcast %40 : vector<1x1xf32> to vector<16x16xf32>
    %143 = arith.mulf %142, %1 : vector<16x16xf32>
    %144 = arith.addf %3, %143 : vector<16x16xf32>
    %145 = vector.broadcast %73 : vector<1x1xf32> to vector<16x16xf32>
    %146 = arith.mulf %145, %3 : vector<16x16xf32>
    %147 = arith.addf %144, %146 : vector<16x16xf32>
    %148 = vector.broadcast %84 : vector<1x1xf32> to vector<16x16xf32>
    %149 = arith.mulf %148, %5 : vector<16x16xf32>
    %150 = arith.addf %147, %149 : vector<16x16xf32>
    %151 = vector.broadcast %95 : vector<1x1xf32> to vector<16x16xf32>
    %152 = arith.mulf %151, %7 : vector<16x16xf32>
    %153 = arith.addf %150, %152 : vector<16x16xf32>
    %c0_35 = arith.constant 0 : index
    %c16 = arith.constant 16 : index
    %154 = vector.load %arg5[%c0_35, %c16] : memref<16x64xf32, #tpu.memory_space<vmem>>, vector<16x16xf32>
    tpu.vector_store %arg5[%c0_35, %c16], %153 {strides = array<i32>} : memref<16x64xf32, #tpu.memory_space<vmem>>, vector<16x16xf32>,
    %155 = vector.broadcast %51 : vector<1x1xf32> to vector<16x16xf32>
    %156 = arith.mulf %155, %1 : vector<16x16xf32>
    %157 = arith.addf %5, %156 : vector<16x16xf32>
    %158 = vector.broadcast %84 : vector<1x1xf32> to vector<16x16xf32>
    %159 = arith.mulf %158, %3 : vector<16x16xf32>
    %160 = arith.addf %157, %159 : vector<16x16xf32>
    %161 = vector.broadcast %106 : vector<1x1xf32> to vector<16x16xf32>
    %162 = arith.mulf %161, %5 : vector<16x16xf32>
    %163 = arith.addf %160, %162 : vector<16x16xf32>
    %164 = vector.broadcast %117 : vector<1x1xf32> to vector<16x16xf32>
    %165 = arith.mulf %164, %7 : vector<16x16xf32>
    %166 = arith.addf %163, %165 : vector<16x16xf32>
    %c0_36 = arith.constant 0 : index
    %c32 = arith.constant 32 : index
    %167 = vector.load %arg5[%c0_36, %c32] : memref<16x64xf32, #tpu.memory_space<vmem>>, vector<16x16xf32>
    tpu.vector_store %arg5[%c0_36, %c32], %166 {strides = array<i32>} : memref<16x64xf32, #tpu.memory_space<vmem>>, vector<16x16xf32>,
    %168 = vector.broadcast %62 : vector<1x1xf32> to vector<16x16xf32>
    %169 = arith.mulf %168, %1 : vector<16x16xf32>
    %170 = arith.addf %7, %169 : vector<16x16xf32>
    %171 = vector.broadcast %95 : vector<1x1xf32> to vector<16x16xf32>
    %172 = arith.mulf %171, %3 : vector<16x16xf32>
    %173 = arith.addf %170, %172 : vector<16x16xf32>
    %174 = vector.broadcast %117 : vector<1x1xf32> to vector<16x16xf32>
    %175 = arith.mulf %174, %5 : vector<16x16xf32>
    %176 = arith.addf %173, %175 : vector<16x16xf32>
    %177 = vector.broadcast %128 : vector<1x1xf32> to vector<16x16xf32>
    %178 = arith.mulf %177, %7 : vector<16x16xf32>
    %179 = arith.addf %176, %178 : vector<16x16xf32>
    %c0_37 = arith.constant 0 : index
    %c48 = arith.constant 48 : index
    %180 = vector.load %arg5[%c0_37, %c48] : memref<16x64xf32, #tpu.memory_space<vmem>>, vector<16x16xf32>
    tpu.vector_store %arg5[%c0_37, %c48], %179 {strides = array<i32>} : memref<16x64xf32, #tpu.memory_space<vmem>>, vector<16x16xf32>,
    %181 = vector.shape_cast %10 : vector<4x16x128xf32> to vector<64x128xf32>
    %c0_38 = arith.constant 0 : index
    %c0_39 = arith.constant 0 : index
    %182 = vector.load %arg5[%c0_38, %c0_39] : memref<16x64xf32, #tpu.memory_space<vmem>>, vector<16x64xf32>
    %cst_40 = arith.constant dense<0.000000e+00> : vector<16x128xf32>
    %183 = tpu.matmul %182, %181, %cst_40 {dimension_numbers = #tpu.dot_dimension_numbers<[1], [0], [0], [1], [0, 0, 1, 1], [], []>} : vector<16x64xf32>, vector<64x128xf32>, vector<16x128xf32> -> vector<16x128xf32>
    %184 = vector.broadcast %8 : vector<16x1xf32> to vector<16x128xf32>
    %185 = arith.addf %183, %184 : vector<16x128xf32>
    %cst_41 = arith.constant 0.000000e+00 : f32
    %186 = vector.broadcast %cst_41 : f32 to vector<16x128xf32>
    %187 = arith.maximumf %185, %186 : vector<16x128xf32>
    %c0_42 = arith.constant 0 : index
    %c0_43 = arith.constant 0 : index
    %c0_44 = arith.constant 0 : index
    %188 = vector.load %arg4[%c0_42, %c0_43, %c0_44] : memref<1x16x128xf32, #tpu.memory_space<vmem>>, vector<1x16x128xf32>
    %189 = vector.shape_cast %188 : vector<1x16x128xf32> to vector<16x128xf32>
    %190 = vector.shape_cast %187 : vector<16x128xf32> to vector<1x16x128xf32>
    tpu.vector_store %arg4[%c0_42, %c0_43, %c0_44], %190 {strides = array<i32>} : memref<1x16x128xf32, #tpu.memory_space<vmem>>, vector<1x16x128xf32>,
    return
  }
  func.func @transform_0(%arg0: i32) -> (i32, i32, i32, i32) {
    %c0_i32 = arith.constant 0 : i32
    %c0_i32_0 = arith.constant 0 : i32
    %c0_i32_1 = arith.constant 0 : i32
    %c0_i32_2 = arith.constant 0 : i32
    return %arg0, %c0_i32, %c0_i32_0, %c0_i32_1 : i32, i32, i32, i32
  }
  func.func @transform_1(%arg0: i32) -> (i32, i32, i32) {
    %c0_i32 = arith.constant 0 : i32
    %c0_i32_0 = arith.constant 0 : i32
    %c0_i32_1 = arith.constant 0 : i32
    %c0_i32_2 = arith.constant 0 : i32
    return %c0_i32, %c0_i32_0, %c0_i32_1 : i32, i32, i32
  }
  func.func @transform_2(%arg0: i32) -> (i32, i32) {
    %c0_i32 = arith.constant 0 : i32
    %c0_i32_0 = arith.constant 0 : i32
    %c0_i32_1 = arith.constant 0 : i32
    return %c0_i32, %c0_i32_0 : i32, i32
  }
  func.func @transform_3(%arg0: i32) -> (i32, i32, i32) {
    %c0_i32 = arith.constant 0 : i32
    %c0_i32_0 = arith.constant 0 : i32
    %c0_i32_1 = arith.constant 0 : i32
    return %arg0, %c0_i32, %c0_i32_0 : i32, i32, i32
  }
}

</mosaic_0001>

<llo_original>
// kernel: tpu_custom_call.1
$region0: #{tpu_custom_call.1}
  #allocation0 [shape = 'u32[]', space=smem, size = 0x4, offset = 0x4, fixed_abs, tag = 'smem constant byte address 0x4 - core index']
  #allocation1 [shape = 'u32[144,128]{1,0:T(1,128)}', space=vmem, size = 0x12000, scoped, tag = 'internal scratch']
  #allocation2 [shape = 'f32[16,64]{1,0:T(8,128)}', space=vmem, size = 0x2000, scoped, tag = 'scratch operand']
  %s0 = inlined_call_operand.hbm [shape: f32[2,4,16,128], index: 0, kind: input, shape index: {}]
  %s1 = inlined_call_operand.hbm [shape: f32[4,16,16], index: 1, kind: input, shape index: {}]
  %s2 = inlined_call_operand.vmem [shape: f32[16,1], index: 2, kind: input, shape index: {}]
  %s3 = inlined_call_operand.hbm [shape: f32[2,16,128], index: 3, kind: output, shape index: {}]
  %s4 = sld [smem:[#allocation0]]
  $region53: #{tpu_custom_call.1} parent=0
    _
  %s6 = ssub.s32 1, %s4
  %s7 = scalar_select 0, %s6, %s4
  $region1: #{tpu_custom_call.1} parent=0
    #allocation3 [shape = 'u8[65536]{0}', space=vmem, size = 0x10000, scoped, tag = 'input window, operand 0']
    #allocation4 [shape = 's32[2]{0}', space=sflag, size = 0x8, scoped, tag = 'scoped memory for tpu_custom_call.1']
    #allocation5 [shape = 's32[2]{0}', space=sflag, size = 0x8, scoped, tag = 'scoped memory for tpu_custom_call.1']
    #allocation6 [shape = 'u8[32768]{0}', space=vmem, size = 0x8000, scoped, tag = 'input window, operand 1, single buffered']
    #allocation7 [shape = 's32[1]{0}', space=sflag, size = 0x4, scoped, tag = 'scoped memory for tpu_custom_call.1']
    #allocation8 [shape = 'u8[16384]{0}', space=vmem, size = 0x4000, scoped, tag = 'output window, operand 0']
    %8 = vsyncpa [#allocation4], 0
    %s9 = scalar_lea.sflag [#allocation4], 1
    %10 = vsyncpa %s9, 0
    %11 = vsyncpa [#allocation7], 0
    %12 = vsyncpa [#allocation5], 0
    %s13 = scalar_lea.sflag [#allocation5], 1
    %14 = vsyncpa %s13, 0
    loop: start=0, step=1, limit=4
    $region2: #{tpu_custom_call.1} parent=1 // loop_pre_header
      _
    $region3: #{tpu_custom_call.1} parent=1 // loop_header
      %s16 = sphi 0, %s20
      %p17 = scmp.ge.s32.totalorder %s16, 4
      %s26 = sphi 0, %s28
      %s29 = sphi 0, %s26
      %s30 = sphi 0, %s29
      %s46 = sphi 0, %s30
      %s50 = sphi 0, %s50
      %s52 = sphi 0, %s50
      %s53 = sphi 0, %s52
      %s67 = sphi 0, %s53
      %s71 = sphi 0, %s71
      %s73 = sphi 0, %s71
      %s74 = sphi 0, %s73
      %s88 = sphi 0, %s74
      %s94 = sphi 0, %s96
      %s97 = sphi 0, %s94
      %s98 = sphi 0, %s97
      %s114 = sphi 0, %s98
    $region4: #{tpu_custom_call.1} parent=1 // loop_header_branch
      %19 = sbr.rel (%p17) target = $region8
    $region5: #{tpu_custom_call.1} parent=1 // loop_body
      %s21 = ssub.s32 %s16, 1
      %s22 = ssub.s32 %s16, 2
      %s23 = sadd.s32 %s16, 1
      %s24 = ssub.s32 %s16, %s23
      %p25 = scmp.eq.s32.totalorder %s24, 0
      %s27 = sadd.s32 %s26, 1
      %s28 = scalar_select %p25, %s26, %s27
      %p31 = pneg %p25
      %p32 = scmp.eq.s32.totalorder %s16, 1
      %p33 = por %p31, %p32
      %p34 = scmp.ne.s32.totalorder %s26, %s29
      %p35 = scmp.eq.s32.totalorder %s16, 0
      %p36 = por %p34, %p35
      %p37 = scmp.ne.s32.totalorder %s26, %s29
      %p38 = scmp.eq.s32.totalorder %s21, 1
      %p39 = por %p37, %p38
      %p40 = scmp.ne.s32.totalorder %s29, %s30
      %p41 = scmp.eq.s32.totalorder %s21, 0
      %p42 = por %p40, %p41
      %p43 = scmp.ne.s32.totalorder %s29, %s30
      %p44 = scmp.eq.s32.totalorder %s22, 1
      %p45 = por %p43, %p44
      %p47 = scmp.ne.s32.totalorder %s30, %s46
      %p48 = scmp.eq.s32.totalorder %s22, 0
      %p49 = por %p47, %p48
      %s51 = sadd.s32 %s50, 1
      %p54 = scmp.eq.s32.totalorder %s16, 1
      %p55 = scmp.ne.s32.totalorder %s50, %s52
      %p56 = scmp.eq.s32.totalorder %s16, 0
      %p57 = por %p55, %p56
      %p58 = scmp.ne.s32.totalorder %s50, %s52
      %p59 = scmp.eq.s32.totalorder %s21, 1
      %p60 = por %p58, %p59
      %p61 = scmp.ne.s32.totalorder %s52, %s53
      %p62 = scmp.eq.s32.totalorder %s21, 0
      %p63 = por %p61, %p62
      %p64 = scmp.ne.s32.totalorder %s52, %s53
      %p65 = scmp.eq.s32.totalorder %s22, 1
      %p66 = por %p64, %p65
      %p68 = scmp.ne.s32.totalorder %s53, %s67
      %p69 = scmp.eq.s32.totalorder %s22, 0
      %p70 = por %p68, %p69
      %s72 = sadd.s32 %s71, 1
      %p75 = scmp.eq.s32.totalorder %s16, 1
      %p76 = scmp.ne.s32.totalorder %s71, %s73
      %p77 = scmp.eq.s32.totalorder %s16, 0
      %p78 = por %p76, %p77
      %p79 = scmp.ne.s32.totalorder %s71, %s73
      %p80 = scmp.eq.s32.totalorder %s21, 1
      %p81 = por %p79, %p80
      %p82 = scmp.ne.s32.totalorder %s73, %s74
      %p83 = scmp.eq.s32.totalorder %s21, 0
      %p84 = por %p82, %p83
      %p85 = scmp.ne.s32.totalorder %s73, %s74
      %p86 = scmp.eq.s32.totalorder %s22, 1
      %p87 = por %p85, %p86
      %p89 = scmp.ne.s32.totalorder %s74, %s88
      %p90 = scmp.eq.s32.totalorder %s22, 0
      %p91 = por %p89, %p90
      %s92 = ssub.s32 %s16, %s23
      %p93 = scmp.eq.s32.totalorder %s92, 0
      %s95 = sadd.s32 %s94, 1
      %s96 = scalar_select %p93, %s94, %s95
      %p99 = pneg %p93
      %p100 = scmp.eq.s32.totalorder %s16, 1
      %p101 = por %p99, %p100
      %p102 = scmp.ne.s32.totalorder %s94, %s97
      %p103 = scmp.eq.s32.totalorder %s16, 0
      %p104 = por %p102, %p103
      %p105 = scmp.ne.s32.totalorder %s94, %s97
      %p106 = scmp.eq.s32.totalorder %s21, 1
      %p107 = por %p105, %p106
      %p108 = scmp.ne.s32.totalorder %s97, %s98
      %p109 = scmp.eq.s32.totalorder %s21, 0
      %p110 = por %p108, %p109
      %p111 = scmp.ne.s32.totalorder %s97, %s98
      %p112 = scmp.eq.s32.totalorder %s22, 1
      %p113 = por %p111, %p112
      %p115 = scmp.ne.s32.totalorder %s98, %s114
      %p116 = scmp.eq.s32.totalorder %s22, 0
      %p117 = por %p115, %p116
      %p118 = scmp.le.s32.totalorder 1, %s16
      %p119 = scmp.lt.s32.totalorder %s16, 3
      %p120 = pnand %p118, %p119
      %p121 = pneg %p120
      // Predicated region
      $region9: #{tpu_custom_call.1} parent=5 // pred_check
        _
      $region10: #{tpu_custom_call.1} parent=5 // pred_check_branch
        %123 = sbr.rel (%p120) target = $region12
      $region11: #{tpu_custom_call.1} parent=5 // pred_region
        %s124 = ssub.s32 %s16, 1
        // Predicated region
        $region13: #{tpu_custom_call.1} parent=11 // pred_check
          %p125 = pneg %p63
        $region14: #{tpu_custom_call.1} parent=11 // pred_check_branch
          %127 = sbr.rel (%p125) target = $region16
        $region15: #{tpu_custom_call.1} parent=11 // pred_region
          %s129 = ssub.s32 1024, 1024
          %130 = vsyncadd [#allocation7], %s129
          %s131 = sshll.u32 [#allocation6], 4
          %s132 = int_to_ptr.vmem [resolvable:$true] %s131
          %137 = dma.hbm_to_vmem [thread:$0]  %s1, 1024, %s132, [#allocation7], 128, 128, 8
        $region16: #{tpu_custom_call.1} parent=11 // pred_fallthru
          _
        // Predicated region
        $region17: #{tpu_custom_call.1} parent=11 // pred_check
          %p138 = pneg %p84
        $region18: #{tpu_custom_call.1} parent=11 // pred_check_branch
          %140 = sbr.rel (%p138) target = $region20
        $region19: #{tpu_custom_call.1} parent=11 // pred_region
          _
        $region20: #{tpu_custom_call.1} parent=11 // pred_fallthru
          _
      $region12: #{tpu_custom_call.1} parent=5 // pred_fallthru
        _
      %p141 = scmp.lt.s32.totalorder %s16, 2
      // Predicated region
      $region21: #{tpu_custom_call.1} parent=5 // pred_check
        %p142 = pneg %p141
      $region22: #{tpu_custom_call.1} parent=5 // pred_check_branch
        %144 = sbr.rel (%p142) target = $region24
      $region23: #{tpu_custom_call.1} parent=5 // pred_region
        // Predicated region
        $region25: #{tpu_custom_call.1} parent=23 // pred_check
          %p145 = pneg %p36
        $region26: #{tpu_custom_call.1} parent=23 // pred_check_branch
          %147 = sbr.rel (%p145) target = $region28
        $region27: #{tpu_custom_call.1} parent=23 // pred_region
          %s148 = sand.u32 %s26, 1
          %s149 = scalar_lea.sflag [#allocation4], %s148
          %s150 = sand.u32 %s26, 1
          %s151 = smul.addr %s150, 64
          %s152 = scalar_lea.vmem [#allocation3], %s151
          %s154 = ssub.s32 1024, 1024
          %155 = vsyncadd %s149, %s154
          %s156 = smul.addr %s16, 8
          %s157 = smul.addr %s156, 128
          %s158 = scalar_lea.hbm %s0, %s157
          %s159 = sshll.u32 %s152, 4
          %s160 = int_to_ptr.vmem [resolvable:$true] %s159
          %165 = dma.hbm_to_vmem [thread:$0]  %s158, 1024, %s160, %s149, 128, 128, 8
        $region28: #{tpu_custom_call.1} parent=23 // pred_fallthru
          _
      $region24: #{tpu_custom_call.1} parent=5 // pred_fallthru
        _
      %p166 = scmp.le.s32.totalorder 1, %s16
      %p167 = scmp.lt.s32.totalorder %s16, 3
      %p168 = pnand %p166, %p167
      %p169 = pneg %p168
      // Predicated region
      $region29: #{tpu_custom_call.1} parent=5 // pred_check
        _
      $region30: #{tpu_custom_call.1} parent=5 // pred_check_branch
        %171 = sbr.rel (%p168) target = $region32
      $region31: #{tpu_custom_call.1} parent=5 // pred_region
        %s172 = ssub.s32 %s16, 1
        %s173 = sand.u32 %s29, 1
        %s174 = scalar_lea.sflag [#allocation4], %s173
        %s175 = sand.u32 %s29, 1
        %s176 = smul.addr %s175, 64
        %s177 = scalar_lea.vmem [#allocation3], %s176
        // Predicated region
        $region33: #{tpu_custom_call.1} parent=31 // pred_check
          %p178 = pneg %p42
        $region34: #{tpu_custom_call.1} parent=31 // pred_check_branch
          %180 = sbr.rel (%p178) target = $region36
        $region35: #{tpu_custom_call.1} parent=31 // pred_region
          %181 = dma.done %s174, 1024
        $region36: #{tpu_custom_call.1} parent=31 // pred_fallthru
          _
        // Predicated region
        $region37: #{tpu_custom_call.1} parent=31 // pred_check
          %p182 = pneg %p63
        $region38: #{tpu_custom_call.1} parent=31 // pred_check_branch
          %184 = sbr.rel (%p182) target = $region40
        $region39: #{tpu_custom_call.1} parent=31 // pred_region
          %185 = dma.done [#allocation7], 1024
        $region40: #{tpu_custom_call.1} parent=31 // pred_fallthru
          _
        %s186 = sand.u32 %s29, 1
        %s187 = scalar_lea.sflag [#allocation4], %s186
        %s188 = sand.u32 %s29, 1
        %s189 = smul.addr %s188, 64
        %s190 = scalar_lea.vmem [#allocation3], %s189
        %p191 = pneg %p42
        %p192 = pneg %p39
        %p193 = pneg %p63
        %p194 = pneg %p60
        %p195 = pneg %p84
        %p196 = pneg %p81
        %p197 = pneg %p110
        %p198 = pneg %p107
        %s199 = sand.u32 %s97, 1
        %s200 = scalar_lea.sflag [#allocation5], %s199
        %s201 = sand.u32 %s97, 1
        %s202 = smul.addr %s201, 16
        %s203 = scalar_lea.vmem [#allocation8], %s202
        %v204 = vld [vmem:[#allocation6] sm:$0xff]
        %v205 = vld [vmem:[#allocation6 + $0x8] sm:$0xff]
        %s206 = scalar_lea.vmem [#allocation6], 16
        %v207 = vld [vmem:[%s206] sm:$0xff]
        %v208 = vld [vmem:[%s206 + $0x8] sm:$0xff]
        %s209 = scalar_lea.vmem [#allocation6], 32
        %v210 = vld [vmem:[%s209] sm:$0xff]
        %v211 = vld [vmem:[%s209 + $0x8] sm:$0xff]
        %s212 = scalar_lea.vmem [#allocation6], 48
        %v213 = vld [vmem:[%s212] sm:$0xff]
        %v214 = vld [vmem:[%s212 + $0x8] sm:$0xff]
        %v215 = vld [vmem:[%s2] sm:$0xff]
        %v216 = vld [vmem:[%s2 + $0x8] sm:$0xff]
        %v217 = vld [vmem:[%s177] sm:$0xff]
        %v218 = vld [vmem:[%s177 + $0x8] sm:$0xff]
        %v219 = vld [vmem:[%s177 + $0x10] sm:$0xff]
        %v220 = vld [vmem:[%s177 + $0x18] sm:$0xff]
        %v221 = vld [vmem:[%s177 + $0x20] sm:$0xff]
        %v222 = vld [vmem:[%s177 + $0x28] sm:$0xff]
        %v223 = vld [vmem:[%s177 + $0x30] sm:$0xff]
        %v224 = vld [vmem:[%s177 + $0x38] sm:$0xff]
        %v225 = vmul.f32 %v217, %v217
        %v226 = vmul.f32 %v218, %v218
        %v227 = vadd.f32 %v225, %v226
        %228 = vadd.xlane.f32.xlu0 %v227
        %v229 = vpop.xlane.xlu0 %228
        %v230 = vrot.slane %v229, 4
        %v231 = vadd.f32 %v229, %v230
        %v232 = vrot.slane %v231, 2
        %v233 = vadd.f32 %v231, %v232
        %v234 = vrot.slane %v233, 1
        %v235 = vadd.f32 %v233, %v234
        %s236 = vtos %v235
        %v237 = vstv %s236
        %v238 = vxor.u32 %v237, 2147483648
        %v239 = vmul.f32 %v238, 1.442695
        %v240 = vpow.pop %v239
        %v241 = vadd.f32 %v240, 1.0
        %v242 = vrcp.pop %v241
        %v243 = vmul.f32 1.0, %v242
        %v244 = vmul.f32 %v217, %v219
        %v245 = vmul.f32 %v218, %v220
        %v246 = vadd.f32 %v244, %v245
        %247 = vadd.xlane.f32.xlu0 %v246
        %v248 = vpop.xlane.xlu0 %247
        %v249 = vrot.slane %v248, 4
        %v250 = vadd.f32 %v248, %v249
        %v251 = vrot.slane %v250, 2
        %v252 = vadd.f32 %v250, %v251
        %v253 = vrot.slane %v252, 1
        %v254 = vadd.f32 %v252, %v253
        %s255 = vtos %v254
        %v256 = vstv %s255
        %v257 = vxor.u32 %v256, 2147483648
        %v258 = vmul.f32 %v257, 1.442695
        %v259 = vpow.pop %v258
        %v260 = vadd.f32 %v259, 1.0
        %v261 = vrcp.pop %v260
        %v262 = vmul.f32 1.0, %v261
        %v263 = vmul.f32 %v217, %v221
        %v264 = vmul.f32 %v218, %v222
        %v265 = vadd.f32 %v263, %v264
        %266 = vadd.xlane.f32.xlu0 %v265
        %v267 = vpop.xlane.xlu0 %266
        %v268 = vrot.slane %v267, 4
        %v269 = vadd.f32 %v267, %v268
        %v270 = vrot.slane %v269, 2
        %v271 = vadd.f32 %v269, %v270
        %v272 = vrot.slane %v271, 1
        %v273 = vadd.f32 %v271, %v272
        %s274 = vtos %v273
        %v275 = vstv %s274
        %v276 = vxor.u32 %v275, 2147483648
        %v277 = vmul.f32 %v276, 1.442695
        %v278 = vpow.pop %v277
        %v279 = vadd.f32 %v278, 1.0
        %v280 = vrcp.pop %v279
        %v281 = vmul.f32 1.0, %v280
        %v282 = vmul.f32 %v217, %v223
        %v283 = vmul.f32 %v218, %v224
        %v284 = vadd.f32 %v282, %v283
        %285 = vadd.xlane.f32.xlu0 %v284
        %v286 = vpop.xlane.xlu0 %285
        %v287 = vrot.slane %v286, 4
        %v288 = vadd.f32 %v286, %v287
        %v289 = vrot.slane %v288, 2
        %v290 = vadd.f32 %v288, %v289
        %v291 = vrot.slane %v290, 1
        %v292 = vadd.f32 %v290, %v291
        %s293 = vtos %v292
        %v294 = vstv %s293
        %v295 = vxor.u32 %v294, 2147483648
        %v296 = vmul.f32 %v295, 1.442695
        %v297 = vpow.pop %v296
        %v298 = vadd.f32 %v297, 1.0
        %v299 = vrcp.pop %v298
        %v300 = vmul.f32 1.0, %v299
        %v301 = vmul.f32 %v219, %v219
        %v302 = vmul.f32 %v220, %v220
        %v303 = vadd.f32 %v301, %v302
        %304 = vadd.xlane.f32.xlu0 %v303
        %v305 = vpop.xlane.xlu0 %304
        %v306 = vrot.slane %v305, 4
        %v307 = vadd.f32 %v305, %v306
        %v308 = vrot.slane %v307, 2
        %v309 = vadd.f32 %v307, %v308
        %v310 = vrot.slane %v309, 1
        %v311 = vadd.f32 %v309, %v310
        %s312 = vtos %v311
        %v313 = vstv %s312
        %v314 = vxor.u32 %v313, 2147483648
        %v315 = vmul.f32 %v314, 1.442695
        %v316 = vpow.pop %v315
        %v317 = vadd.f32 %v316, 1.0
        %v318 = vrcp.pop %v317
        %v319 = vmul.f32 1.0, %v318
        %v320 = vmul.f32 %v219, %v221
        %v321 = vmul.f32 %v220, %v222
        %v322 = vadd.f32 %v320, %v321
        %323 = vadd.xlane.f32.xlu0 %v322
        %v324 = vpop.xlane.xlu0 %323
        %v325 = vrot.slane %v324, 4
        %v326 = vadd.f32 %v324, %v325
        %v327 = vrot.slane %v326, 2
        %v328 = vadd.f32 %v326, %v327
        %v329 = vrot.slane %v328, 1
        %v330 = vadd.f32 %v328, %v329
        %s331 = vtos %v330
        %v332 = vstv %s331
        %v333 = vxor.u32 %v332, 2147483648
        %v334 = vmul.f32 %v333, 1.442695
        %v335 = vpow.pop %v334
        %v336 = vadd.f32 %v335, 1.0
        %v337 = vrcp.pop %v336
        %v338 = vmul.f32 1.0, %v337
        %v339 = vmul.f32 %v219, %v223
        %v340 = vmul.f32 %v220, %v224
        %v341 = vadd.f32 %v339, %v340
        %342 = vadd.xlane.f32.xlu0 %v341
        %v343 = vpop.xlane.xlu0 %342
        %v344 = vrot.slane %v343, 4
        %v345 = vadd.f32 %v343, %v344
        %v346 = vrot.slane %v345, 2
        %v347 = vadd.f32 %v345, %v346
        %v348 = vrot.slane %v347, 1
        %v349 = vadd.f32 %v347, %v348
        %s350 = vtos %v349
        %v351 = vstv %s350
        %v352 = vxor.u32 %v351, 2147483648
        %v353 = vmul.f32 %v352, 1.442695
        %v354 = vpow.pop %v353
        %v355 = vadd.f32 %v354, 1.0
        %v356 = vrcp.pop %v355
        %v357 = vmul.f32 1.0, %v356
        %v358 = vmul.f32 %v221, %v221
        %v359 = vmul.f32 %v222, %v222
        %v360 = vadd.f32 %v358, %v359
        %361 = vadd.xlane.f32.xlu0 %v360
        %v362 = vpop.xlane.xlu0 %361
        %v363 = vrot.slane %v362, 4
        %v364 = vadd.f32 %v362, %v363
        %v365 = vrot.slane %v364, 2
        %v366 = vadd.f32 %v364, %v365
        %v367 = vrot.slane %v366, 1
        %v368 = vadd.f32 %v366, %v367
        %s369 = vtos %v368
        %v370 = vstv %s369
        %v371 = vxor.u32 %v370, 2147483648
        %v372 = vmul.f32 %v371, 1.442695
        %v373 = vpow.pop %v372
        %v374 = vadd.f32 %v373, 1.0
        %v375 = vrcp.pop %v374
        %v376 = vmul.f32 1.0, %v375
        %v377 = vmul.f32 %v221, %v223
        %v378 = vmul.f32 %v222, %v224
        %v379 = vadd.f32 %v377, %v378
        %380 = vadd.xlane.f32.xlu0 %v379
        %v381 = vpop.xlane.xlu0 %380
        %v382 = vrot.slane %v381, 4
        %v383 = vadd.f32 %v381, %v382
        %v384 = vrot.slane %v383, 2
        %v385 = vadd.f32 %v383, %v384
        %v386 = vrot.slane %v385, 1
        %v387 = vadd.f32 %v385, %v386
        %s388 = vtos %v387
        %v389 = vstv %s388
        %v390 = vxor.u32 %v389, 2147483648
        %v391 = vmul.f32 %v390, 1.442695
        %v392 = vpow.pop %v391
        %v393 = vadd.f32 %v392, 1.0
        %v394 = vrcp.pop %v393
        %v395 = vmul.f32 1.0, %v394
        %v396 = vmul.f32 %v223, %v223
        %v397 = vmul.f32 %v224, %v224
        %v398 = vadd.f32 %v396, %v397
        %399 = vadd.xlane.f32.xlu0 %v398
        %v400 = vpop.xlane.xlu0 %399
        %v401 = vrot.slane %v400, 4
        %v402 = vadd.f32 %v400, %v401
        %v403 = vrot.slane %v402, 2
        %v404 = vadd.f32 %v402, %v403
        %v405 = vrot.slane %v404, 1
        %v406 = vadd.f32 %v404, %v405
        %s407 = vtos %v406
        %v408 = vstv %s407
        %v409 = vxor.u32 %v408, 2147483648
        %v410 = vmul.f32 %v409, 1.442695
        %v411 = vpow.pop %v410
        %v412 = vadd.f32 %v411, 1.0
        %v413 = vrcp.pop %v412
        %v414 = vmul.f32 1.0, %v413
        %v415 = vmul.f32 %v243, %v204
        %v416 = vmul.f32 %v243, %v205
        %v417 = vadd.f32 %v204, %v415
        %v418 = vadd.f32 %v205, %v416
        %v419 = vmul.f32 %v262, %v207
        %v420 = vmul.f32 %v262, %v208
        %v421 = vadd.f32 %v417, %v419
        %v422 = vadd.f32 %v418, %v420
        %v423 = vmul.f32 %v281, %v210
        %v424 = vmul.f32 %v281, %v211
        %v425 = vadd.f32 %v421, %v423
        %v426 = vadd.f32 %v422, %v424
        %v427 = vmul.f32 %v300, %v213
        %v428 = vmul.f32 %v300, %v214
        %v429 = vadd.f32 %v425, %v427
        %v430 = vadd.f32 %v426, %v428
        %vm431 = vcmask 130048
        %432 = vst.msk [vmem:[#allocation2] sm:$0xff] %vm431, %v429
        %433 = vst.msk [vmem:[#allocation2 + $0x8] sm:$0xff] %vm431, %v430
        %v434 = vmul.f32 %v262, %v204
        %v435 = vmul.f32 %v262, %v205
        %v436 = vadd.f32 %v207, %v434
        %v437 = vadd.f32 %v208, %v435
        %v438 = vmul.f32 %v319, %v207
        %v439 = vmul.f32 %v319, %v208
        %v440 = vadd.f32 %v436, %v438
        %v441 = vadd.f32 %v437, %v439
        %v442 = vmul.f32 %v338, %v210
        %v443 = vmul.f32 %v338, %v211
        %v444 = vadd.f32 %v440, %v442
        %v445 = vadd.f32 %v441, %v443
        %v446 = vmul.f32 %v357, %v213
        %v447 = vmul.f32 %v357, %v214
        %v448 = vadd.f32 %v444, %v446
        %v449 = vadd.f32 %v445, %v447
        %452 = vrot.lane.b32.xlu0 %v448, 16
        %v453 = vpop.permute.xlu0 %452
        %454 = vrot.lane.b32.xlu0 %v449, 16
        %v455 = vpop.permute.xlu0 %454
        %vm458 = vcmask 261248
        %459 = vst.msk [vmem:[#allocation2] sm:$0xff] %vm458, %v453
        %460 = vst.msk [vmem:[#allocation2 + $0x8] sm:$0xff] %vm458, %v455
        %v461 = vmul.f32 %v281, %v204
        %v462 = vmul.f32 %v281, %v205
        %v463 = vadd.f32 %v210, %v461
        %v464 = vadd.f32 %v211, %v462
        %v465 = vmul.f32 %v338, %v207
        %v466 = vmul.f32 %v338, %v208
        %v467 = vadd.f32 %v463, %v465
        %v468 = vadd.f32 %v464, %v466
        %v469 = vmul.f32 %v376, %v210
        %v470 = vmul.f32 %v376, %v211
        %v471 = vadd.f32 %v467, %v469
        %v472 = vadd.f32 %v468, %v470
        %v473 = vmul.f32 %v395, %v213
        %v474 = vmul.f32 %v395, %v214
        %v475 = vadd.f32 %v471, %v473
        %v476 = vadd.f32 %v472, %v474
        %479 = vrot.lane.b32.xlu0 %v475, 32
        %v480 = vpop.permute.xlu0 %479
        %481 = vrot.lane.b32.xlu0 %v476, 32
        %v482 = vpop.permute.xlu0 %481
        %vm485 = vcmask 392448
        %486 = vst.msk [vmem:[#allocation2] sm:$0xff] %vm485, %v480
        %487 = vst.msk [vmem:[#allocation2 + $0x8] sm:$0xff] %vm485, %v482
        %v488 = vmul.f32 %v300, %v204
        %v489 = vmul.f32 %v300, %v205
        %v490 = vadd.f32 %v213, %v488
        %v491 = vadd.f32 %v214, %v489
        %v492 = vmul.f32 %v357, %v207
        %v493 = vmul.f32 %v357, %v208
        %v494 = vadd.f32 %v490, %v492
        %v495 = vadd.f32 %v491, %v493
        %v496 = vmul.f32 %v395, %v210
        %v497 = vmul.f32 %v395, %v211
        %v498 = vadd.f32 %v494, %v496
        %v499 = vadd.f32 %v495, %v497
        %v500 = vmul.f32 %v414, %v213
        %v501 = vmul.f32 %v414, %v214
        %v502 = vadd.f32 %v498, %v500
        %v503 = vadd.f32 %v499, %v501
        %506 = vrot.lane.b32.xlu0 %v502, 48
        %v507 = vpop.permute.xlu0 %506
        %508 = vrot.lane.b32.xlu0 %v503, 48
        %v509 = vpop.permute.xlu0 %508
        %vm512 = vcmask 523648
        %513 = vst.msk [vmem:[#allocation2] sm:$0xff] %vm512, %v507
        %514 = vst.msk [vmem:[#allocation2 + $0x8] sm:$0xff] %vm512, %v509
        %v515 = vld [vmem:[#allocation2] sm:$0xff]
        %v516 = vld [vmem:[#allocation2 + $0x8] sm:$0xff]
        %518 = vset.pattern.permute.xlu0 0
        %519 = vperm.xlu0 %518, %v215
        %v520 = vpop.permute.xlu0 %519
        %523 = vset.pattern.permute.xlu0 0
        %524 = vperm.xlu0 %523, %v216
        %v525 = vpop.permute.xlu0 %524
        %vm527 = vcmask 523264
        %v529 = vsel %vm527, %v515, 0
        %v532 = vsel %vm527, %v516, 0
        %534 = vmatprep.subr.mxu0 0.0
        %535 = vmatpush1.msra.mxu0 0.0
        %536 = vmatprep.subr.mxu0 0.0
        %537 = vmatpush1.msra.mxu0 0.0
        %538 = vmatprep.subr.mxu0 0.0
        %539 = vmatpush1.msra.mxu0 0.0
        %540 = vmatprep.subr.mxu0 0.0
        %541 = vmatpush1.msra.mxu0 0.0
        %542 = vmatprep.subr.mxu0 0.0
        %543 = vmatpush1.msra.mxu0 0.0
        %544 = vmatprep.subr.mxu0 0.0
        %545 = vmatpush1.msra.mxu0 0.0
        %546 = vmatprep.subr.mxu0 0.0
        %547 = vmatpush1.msra.mxu0 0.0
        %548 = vmatprep.subr.mxu0 0.0
        %549 = vmatpush1.msra.mxu0 0.0
        %550 = vmatprep.subr.mxu0 0.0
        %551 = vmatpush1.msra.mxu0 %v224
        %552 = vmatprep.subr.mxu0 0.0
        %553 = vmatpush1.msra.mxu0 %v223
        %554 = vmatprep.subr.mxu0 0.0
        %555 = vmatpush1.msra.mxu0 %v222
        %556 = vmatprep.subr.mxu0 0.0
        %557 = vmatpush1.msra.mxu0 %v221
        %558 = vmatprep.subr.mxu0 0.0
        %559 = vmatpush1.msra.mxu0 %v220
        %560 = vmatprep.subr.mxu0 0.0
        %561 = vmatpush1.msra.mxu0 %v219
        %562 = vmatprep.subr.mxu0 0.0
        %563 = vmatpush1.msra.mxu0 %v218
        %564 = vmatprep.subr.mxu0 0.0
        %565 = vmatpush1.msra.mxu0 %v217
        %566 = vmatprep.subr.mxu0 0.0
        %567 = vmatpush2.msra.mxu0 0.0
        %568 = vmatprep.subr.mxu0 0.0
        %569 = vmatpush2.msra.mxu0 0.0
        %570 = vmatprep.subr.mxu0 0.0
        %571 = vmatpush2.msra.mxu0 0.0
        %572 = vmatprep.subr.mxu0 0.0
        %573 = vmatpush2.msra.mxu0 0.0
        %574 = vmatprep.subr.mxu0 0.0
        %575 = vmatpush2.msra.mxu0 0.0
        %576 = vmatprep.subr.mxu0 0.0
        %577 = vmatpush2.msra.mxu0 0.0
        %578 = vmatprep.subr.mxu0 0.0
        %579 = vmatpush2.msra.mxu0 0.0
        %580 = vmatprep.subr.mxu0 0.0
        %581 = vmatpush2.msra.mxu0 0.0
        %582 = vmatprep.subr.mxu0 0.0
        %583 = vmatpush2.msra.mxu0 0.0
        %584 = vmatprep.subr.mxu0 0.0
        %585 = vmatpush2.msra.mxu0 0.0
        %586 = vmatprep.subr.mxu0 0.0
        %587 = vmatpush2.msra.mxu0 0.0
        %588 = vmatprep.subr.mxu0 0.0
        %589 = vmatpush2.msra.mxu0 0.0
        %590 = vmatprep.subr.mxu0 0.0
        %591 = vmatpush2.msra.mxu0 0.0
        %592 = vmatprep.subr.mxu0 0.0
        %593 = vmatpush2.msra.mxu0 0.0
        %594 = vmatprep.subr.mxu0 0.0
        %595 = vmatpush2.msra.mxu0 0.0
        %596 = vmatprep.subr.mxu0 0.0
        %597 = vmatpush2.msra.mxu0 0.0
        %598 = vmatprep.mubr.f32.mxu0 0.0
        %599 = vmatmul.mubr.f32.gmra.mxu0 %v529
        %v600 = vpop.f32.mrf.mxu0
        %v601 = vadd.f32 %v520, %v600
        %v602 = vpop.f32.mrf.mxu0
        %603 = vmatprep.mubr.f32.mxu0 0.0
        %604 = vmatmul.mubr.f32.gmra.mxu0 %v532
        %v605 = vpop.f32.mrf.mxu0
        %v606 = vadd.f32 %v525, %v605
        %v607 = vpop.f32.mrf.mxu0
        %608 = vdwg.mxu0
        %v609 = vmax.f32 %v601, 0.0
        %v610 = vmax.f32 %v606, 0.0
        %611 = vst [vmem:[%s203] sm:$0xff] %v609
        %612 = vst [vmem:[%s203 + $0x8] sm:$0xff] %v610
        %s613 = sand.u32 %s97, 1
        %s614 = scalar_lea.sflag [#allocation5], %s613
        %s615 = sand.u32 %s97, 1
        %s616 = smul.addr %s615, 16
        %s617 = scalar_lea.vmem [#allocation8], %s616
        // Predicated region
        $region41: #{tpu_custom_call.1} parent=31 // pred_check
          %p618 = pneg %p107
        $region42: #{tpu_custom_call.1} parent=31 // pred_check_branch
          %620 = sbr.rel (%p618) target = $region44
        $region43: #{tpu_custom_call.1} parent=31 // pred_region
          %s622 = ssub.s32 256, 256
          %623 = vsyncadd %s614, %s622
          %s624 = smul.addr %s21, 2
          %s625 = smul.addr %s624, 128
          %s626 = scalar_lea.hbm %s3, %s625
          %s627 = sshll.u32 %s617, 4
          %s628 = int_to_ptr.vmem [resolvable:$true] %s627
          %633 = dma.vmem_to_hbm [thread:$0]  %s628, 256, %s626, %s614, 128, 128, 8
        $region44: #{tpu_custom_call.1} parent=31 // pred_fallthru
          _
      $region32: #{tpu_custom_call.1} parent=5 // pred_fallthru
        _
      %p634 = scmp.le.s32.totalorder 2, %s16
      // Predicated region
      $region45: #{tpu_custom_call.1} parent=5 // pred_check
        %p635 = pneg %p634
      $region46: #{tpu_custom_call.1} parent=5 // pred_check_branch
        %637 = sbr.rel (%p635) target = $region48
      $region47: #{tpu_custom_call.1} parent=5 // pred_region
        %s638 = ssub.s32 %s16, 2
        // Predicated region
        $region49: #{tpu_custom_call.1} parent=47 // pred_check
          %p639 = pneg %p113
        $region50: #{tpu_custom_call.1} parent=47 // pred_check_branch
          %641 = sbr.rel (%p639) target = $region52
        $region51: #{tpu_custom_call.1} parent=47 // pred_region
          %s642 = sand.u32 %s98, 1
          %s643 = scalar_lea.sflag [#allocation5], %s642
          %s644 = sand.u32 %s98, 1
          %s645 = smul.addr %s644, 16
          %s646 = scalar_lea.vmem [#allocation8], %s645
          %647 = dma.done %s643, 256
        $region52: #{tpu_custom_call.1} parent=47 // pred_fallthru
          _
      $region48: #{tpu_custom_call.1} parent=5 // pred_fallthru
        _
    $region6: #{tpu_custom_call.1} parent=1 // loop_footer
      %s20 = sadd.s32 1, %s16
    $region7: #{tpu_custom_call.1} parent=1 // loop_footer_branch
      %15 = sbr.rel target = $region3
    $region8: #{tpu_custom_call.1} parent=1 // loop_exit
      _
    %648 = vsyncpa [#allocation4], 1
    %s649 = scalar_lea.sflag [#allocation4], 1
    %650 = vsyncpa %s649, 1
    %651 = vsyncpa [#allocation7], 1
    %652 = vsyncpa [#allocation5], 1
    %s653 = scalar_lea.sflag [#allocation5], 1
    %654 = vsyncpa %s653, 1

</llo_original>
